<compile_context>
chip_gen: v7x
topology: tpu7x:2x2x1
jax: 0.10.0
libtpu: 0.0.40
codegen_flags: <defaults>
</compile_context>

<pallas_src>
import jax
import jax.numpy as jnp
from jax.experimental import pallas as pl
from jax.experimental.pallas import tpu as pltpu

NZ = 100            # latent dim (module spec)
NGF = 64            # hidden dim (module spec)
NGFP = 128          # padded hidden / lane width (lane-dense everywhere)
STATE_DIM = 24      # condition / output dim
BN_EPS = 1e-5
LRELU_SLOPE = 0.2

# slab row-block offsets
_ROW_W123 = 0
_ROW_WC = NGFP
_ROW_W4 = 2 * NGFP
_ROW_AUX = 3 * NGFP
SLAB_ROWS = 3 * NGFP + 8       # 392
SLAB_COLS = 3 * NGFP           # 384


def _generator_kernel(z_ref, c_ref, w_ref, out_ref):
    z = z_ref[...]                 # (B, 128)  zero-padded latent
    c = c_ref[...]                 # (B, 128)  zero-padded condition (NOT centered;
                                   #           centering is folded into Wc)
    inv_b = 1.0 / z.shape[0]

    aux = w_ref[_ROW_AUX:_ROW_AUX + 8, :]      # (8, 384): rows 0/1/2 = gamma/beta/bc
    gammas = aux[0:1, :]
    betas = aux[1:2, :]

    # fused condition encodings for all three layers: (B, 384), + biases
    ce = jnp.dot(c, w_ref[_ROW_WC:_ROW_WC + NGFP, :],
                 preferred_element_type=jnp.float32) + aux[2:3, :]

    def bn_lrelu(h, i):
        # Training-mode BatchNorm1d: batch mean, biased batch variance.
        # Single-pass statistics (f32), clamped against cancellation.
        s1 = jnp.sum(h, axis=0, keepdims=True)
        s2 = jnp.sum(h * h, axis=0, keepdims=True)
        mu = s1 * inv_b
        var = jnp.maximum(s2 * inv_b - mu * mu, 0.0)
        gamma = gammas[:, i * NGFP:(i + 1) * NGFP]
        beta = betas[:, i * NGFP:(i + 1) * NGFP]
        scale = gamma * jax.lax.rsqrt(var + BN_EPS)
        shift = beta - mu * scale
        hn = h * scale + shift
        # LeakyReLU(0.2); padded lanes stay exactly 0 (gamma=beta=0 there).
        return jnp.where(hn > 0, hn, LRELU_SLOPE * hn)

    h1 = jnp.dot(z, w_ref[_ROW_W123:_ROW_W123 + NGFP, 0:NGFP],
                 preferred_element_type=jnp.float32)
    y1 = bn_lrelu(h1, 0) + ce[:, 0:NGFP]

    h2 = jnp.dot(y1, w_ref[_ROW_W123:_ROW_W123 + NGFP, NGFP:2 * NGFP],
                 preferred_element_type=jnp.float32)
    y2 = bn_lrelu(h2, 1) + ce[:, NGFP:2 * NGFP]

    h3 = jnp.dot(y2, w_ref[_ROW_W123:_ROW_W123 + NGFP, 2 * NGFP:3 * NGFP],
                 preferred_element_type=jnp.float32)
    y3 = bn_lrelu(h3, 2) + ce[:, 2 * NGFP:3 * NGFP]

    # lane-dense output (B, 128); wrapper slices the first STATE_DIM lanes.
    out_ref[...] = jnp.dot(y3, w_ref[_ROW_W4:_ROW_W4 + NGFP, 0:NGFP],
                           preferred_element_type=jnp.float32)


def pack_params(params):
    """ONE-TIME host-side packing of all parameters into a (392, 384) f32 slab.

    * SubtractMeanPos (linear) is folded into the Wc weights.
    * b1/b2/b3 are intentionally dropped: a bias added immediately before a
      TRAINING-mode BatchNorm is cancelled by the batch-mean subtraction.
      (Not valid for eval-mode / running-stats BN.)
    """
    x_sz = STATE_DIM // 2
    m = jnp.eye(STATE_DIM, dtype=jnp.float32)
    m = m.at[:x_sz, :x_sz].add(-1.0 / x_sz)       # centering matrix

    def pad2(a, rows, cols):
        return jnp.pad(a, ((0, rows - a.shape[0]), (0, cols - a.shape[1])))

    w123 = jnp.concatenate(
        [pad2(params[k], NGFP, NGFP) for k in ("w1", "w2", "w3")], axis=1)
    wc = jnp.concatenate(
        [pad2(m @ params[k], NGFP, NGFP) for k in ("wc1", "wc2", "wc3")], axis=1)
    w4 = pad2(params["w4"], NGFP, SLAB_COLS)
    aux = jnp.concatenate([
        jnp.concatenate([pad2(params[k], 1, NGFP) for k in ("g1", "g2", "g3")], axis=1),
        jnp.concatenate([pad2(params[k], 1, NGFP) for k in ("be1", "be2", "be3")], axis=1),
        jnp.concatenate([pad2(params[k], 1, NGFP) for k in ("bc1", "bc2", "bc3")], axis=1),
        jnp.zeros((5, SLAB_COLS), jnp.float32),
    ], axis=0)
    slab = jnp.concatenate([w123, wc, w4, aux], axis=0)
    assert slab.shape == (SLAB_ROWS, SLAB_COLS)
    return slab


@jax.jit
def generator_forward(z, cond, w_slab):
    """z: (B, NZ) f32, cond: (B, STATE_DIM) f32, w_slab: pack_params(...) ->
    (B, STATE_DIM) f32."""
    B = z.shape[0]
    z_pad = jnp.pad(z, ((0, 0), (0, NGFP - NZ)))
    c_pad = jnp.pad(cond, ((0, 0), (0, NGFP - STATE_DIM)))

    flops = 2 * B * NGFP * (4 * NGFP + SLAB_COLS)      # 4 square dots + cond dot
    bytes_acc = 4 * (z_pad.size + c_pad.size + w_slab.size + B * NGFP)

    vmem = pl.BlockSpec(memory_space=pltpu.MemorySpace.VMEM)
    out_pad = pl.pallas_call(
        _generator_kernel,
        out_shape=jax.ShapeDtypeStruct((B, NGFP), jnp.float32),
        in_specs=[vmem, vmem, vmem],
        out_specs=vmem,
        compiler_params=pltpu.CompilerParams(vmem_limit_bytes=32 * 1024 * 1024),
        cost_estimate=pl.CostEstimate(
            flops=flops,
            transcendentals=3 * NGFP,          # rsqrt per feature per BN layer
            bytes_accessed=bytes_acc),
    )(z_pad, c_pad, w_slab)
    return out_pad[:, :STATE_DIM]


def init_params(key):
    """Deterministic synthetic parameters. Weights stored as (in, out).

    b1/b2/b3 are generated and used by the reference (faithful to the PyTorch
    Linear layers) but not fed to the kernel (no-ops before training-mode BN).
    """
    ks = jax.random.split(key, 16)
    s = 0.1
    p = {}
    p["w1"] = jax.random.normal(ks[0], (NZ, NGF), jnp.float32) * s
    p["b1"] = jax.random.normal(ks[1], (1, NGF), jnp.float32) * s
    p["g1"] = jnp.ones((1, NGF), jnp.float32)
    p["be1"] = jnp.zeros((1, NGF), jnp.float32)
    p["wc1"] = jax.random.normal(ks[2], (STATE_DIM, NGF), jnp.float32) * s
    p["bc1"] = jax.random.normal(ks[3], (1, NGF), jnp.float32) * s

    p["w2"] = jax.random.normal(ks[4], (NGF, NGF), jnp.float32) * s
    p["b2"] = jax.random.normal(ks[5], (1, NGF), jnp.float32) * s
    p["g2"] = jnp.ones((1, NGF), jnp.float32)
    p["be2"] = jnp.zeros((1, NGF), jnp.float32)
    p["wc2"] = jax.random.normal(ks[6], (STATE_DIM, NGF), jnp.float32) * s
    p["bc2"] = jax.random.normal(ks[7], (1, NGF), jnp.float32) * s

    p["w3"] = jax.random.normal(ks[8], (NGF, NGF), jnp.float32) * s
    p["b3"] = jax.random.normal(ks[9], (1, NGF), jnp.float32) * s
    p["g3"] = jnp.ones((1, NGF), jnp.float32)
    p["be3"] = jnp.zeros((1, NGF), jnp.float32)
    p["wc3"] = jax.random.normal(ks[10], (STATE_DIM, NGF), jnp.float32) * s
    p["bc3"] = jax.random.normal(ks[11], (1, NGF), jnp.float32) * s

    p["w4"] = jax.random.normal(ks[12], (NGF, STATE_DIM), jnp.float32) * s
    return p


def generator_reference(z, cond, params):
    """Pure-JAX reference, faithful to the PyTorch module (incl. b1/b2/b3 and
    explicit SubtractMeanPos)."""
    x_sz = cond.shape[1] // 2
    pos = cond[:, :x_sz]
    pos = pos - jnp.mean(pos, axis=1, keepdims=True)
    cc = jnp.concatenate([pos, cond[:, x_sz:]], axis=1)

    def block(x, w, b, g, be):
        h = x @ w + b
        mu = jnp.mean(h, axis=0, keepdims=True)
        var = jnp.mean((h - mu) ** 2, axis=0, keepdims=True)
        hn = (h - mu) / jnp.sqrt(var + BN_EPS) * g + be
        return jnp.where(hn > 0, hn, LRELU_SLOPE * hn)

    y1 = block(z, params["w1"], params["b1"], params["g1"], params["be1"]) \
        + cc @ params["wc1"] + params["bc1"]
    y2 = block(y1, params["w2"], params["b2"], params["g2"], params["be2"]) \
        + cc @ params["wc2"] + params["bc2"]
    y3 = block(y2, params["w3"], params["b3"], params["g3"], params["be3"]) \
        + cc @ params["wc3"] + params["bc3"]
    return y3 @ params["w4"]


if __name__ == "__main__":
    key = jax.random.PRNGKey(0)
    kz, kc, kp = jax.random.split(key, 3)

    B = 32  # matches the module's `batch`; must be > 1 for training-mode BN
    z = jax.random.normal(kz, (B, NZ), jnp.float32)
    cond = jax.random.normal(kc, (B, STATE_DIM), jnp.float32)
    params = init_params(kp)

    # One-time packing (cached across forward calls).
    w_slab = jax.block_until_ready(pack_params(params))

    out = jax.block_until_ready(generator_forward(z, cond, w_slab))
    ref = generator_reference(z, cond, params)

    assert out.shape == (B, STATE_DIM)
    max_err = float(jnp.max(jnp.abs(out - ref)))
    assert jnp.allclose(out, ref, atol=2e-3, rtol=2e-3), max_err

    print("KERNEL_OK")
</pallas_src>

<mosaic_0001>
module attributes {stable_mosaic.version = 11 : i64} {
  func.func @_generator_kernel(%arg0: memref<32x128xf32, #tpu.memory_space<vmem>>, %arg1: memref<32x128xf32, #tpu.memory_space<vmem>>, %arg2: memref<392x384xf32, #tpu.memory_space<vmem>>, %arg3: memref<32x128xf32, #tpu.memory_space<vmem>>) attributes {dimension_semantics = [], scalar_prefetch = 0 : i64, scratch_operands = 0 : i64, tpu.core_type = #tpu.core_type<tc>} {
    %c0 = arith.constant 0 : index
    %c0_0 = arith.constant 0 : index
    %0 = vector.load %arg0[%c0, %c0_0] : memref<32x128xf32, #tpu.memory_space<vmem>>, vector<32x128xf32>
    %c0_1 = arith.constant 0 : index
    %c0_2 = arith.constant 0 : index
    %1 = vector.load %arg1[%c0_1, %c0_2] : memref<32x128xf32, #tpu.memory_space<vmem>>, vector<32x128xf32>
    %c384 = arith.constant 384 : index
    %c0_3 = arith.constant 0 : index
    %2 = vector.load %arg2[%c384, %c0_3] : memref<392x384xf32, #tpu.memory_space<vmem>>, vector<8x384xf32>
    %3 = vector.extract_strided_slice %2 {offsets = [0, 0], sizes = [1, 384], strides = [1, 1]} : vector<8x384xf32> to vector<1x384xf32>
    %4 = vector.extract_strided_slice %2 {offsets = [1, 0], sizes = [1, 384], strides = [1, 1]} : vector<8x384xf32> to vector<1x384xf32>
    %c128 = arith.constant 128 : index
    %c0_4 = arith.constant 0 : index
    %5 = vector.load %arg2[%c128, %c0_4] : memref<392x384xf32, #tpu.memory_space<vmem>>, vector<128x384xf32>
    %cst = arith.constant dense<0.000000e+00> : vector<32x384xf32>
    %6 = tpu.matmul %1, %5, %cst {dimension_numbers = #tpu.dot_dimension_numbers<[1], [0], [0], [1], [0, 0, 1, 1], [], []>} : vector<32x128xf32>, vector<128x384xf32>, vector<32x384xf32> -> vector<32x384xf32>
    %7 = vector.extract_strided_slice %2 {offsets = [2, 0], sizes = [1, 384], strides = [1, 1]} : vector<8x384xf32> to vector<1x384xf32>
    %8 = vector.broadcast %7 : vector<1x384xf32> to vector<32x384xf32>
    %9 = arith.addf %6, %8 : vector<32x384xf32>
    %c0_5 = arith.constant 0 : index
    %c0_6 = arith.constant 0 : index
    %10 = vector.load %arg2[%c0_5, %c0_6] : memref<392x384xf32, #tpu.memory_space<vmem>>, vector<128x128xf32>
    %cst_7 = arith.constant dense<0.000000e+00> : vector<32x128xf32>
    %11 = tpu.matmul %0, %10, %cst_7 {dimension_numbers = #tpu.dot_dimension_numbers<[1], [0], [0], [1], [0, 0, 1, 1], [], []>} : vector<32x128xf32>, vector<128x128xf32>, vector<32x128xf32> -> vector<32x128xf32>
    %cst_8 = arith.constant dense<0.000000e+00> : vector<128xf32>
    %12 = vector.multi_reduction <add>, %11, %cst_8 [0] : vector<32x128xf32> to vector<128xf32>
    %13 = vector.shape_cast %12 : vector<128xf32> to vector<1x128xf32>
    %14 = arith.mulf %11, %11 : vector<32x128xf32>
    %cst_9 = arith.constant dense<0.000000e+00> : vector<128xf32>
    %15 = vector.multi_reduction <add>, %14, %cst_9 [0] : vector<32x128xf32> to vector<128xf32>
    %16 = vector.shape_cast %15 : vector<128xf32> to vector<1x128xf32>
    %cst_10 = arith.constant 3.125000e-02 : f32
    %17 = vector.broadcast %cst_10 : f32 to vector<1x128xf32>
    %18 = arith.mulf %13, %17 : vector<1x128xf32>
    %cst_11 = arith.constant 3.125000e-02 : f32
    %19 = vector.broadcast %cst_11 : f32 to vector<1x128xf32>
    %20 = arith.mulf %16, %19 : vector<1x128xf32>
    %21 = arith.mulf %18, %18 : vector<1x128xf32>
    %22 = arith.subf %20, %21 : vector<1x128xf32>
    %cst_12 = arith.constant 0.000000e+00 : f32
    %23 = vector.broadcast %cst_12 : f32 to vector<1x128xf32>
    %24 = arith.maximumf %22, %23 : vector<1x128xf32>
    %25 = vector.extract_strided_slice %3 {offsets = [0, 0], sizes = [1, 128], strides = [1, 1]} : vector<1x384xf32> to vector<1x128xf32>
    %26 = vector.extract_strided_slice %4 {offsets = [0, 0], sizes = [1, 128], strides = [1, 1]} : vector<1x384xf32> to vector<1x128xf32>
    %cst_13 = arith.constant 9.99999974E-6 : f32
    %27 = vector.broadcast %cst_13 : f32 to vector<1x128xf32>
    %28 = arith.addf %24, %27 : vector<1x128xf32>
    %29 = math.rsqrt %28 : vector<1x128xf32>
    %30 = arith.mulf %25, %29 : vector<1x128xf32>
    %31 = arith.mulf %18, %30 : vector<1x128xf32>
    %32 = arith.subf %26, %31 : vector<1x128xf32>
    %33 = vector.broadcast %30 : vector<1x128xf32> to vector<32x128xf32>
    %34 = arith.mulf %11, %33 : vector<32x128xf32>
    %35 = vector.broadcast %32 : vector<1x128xf32> to vector<32x128xf32>
    %36 = arith.addf %34, %35 : vector<32x128xf32>
    %cst_14 = arith.constant 0.000000e+00 : f32
    %37 = vector.broadcast %cst_14 : f32 to vector<32x128xf32>
    %38 = arith.cmpf ogt, %36, %37 : vector<32x128xf32>
    %cst_15 = arith.constant 2.000000e-01 : f32
    %39 = vector.broadcast %cst_15 : f32 to vector<32x128xf32>
    %40 = arith.mulf %39, %36 : vector<32x128xf32>
    %41 = arith.select %38, %36, %40 : vector<32x128xi1>, vector<32x128xf32>
    %42 = vector.extract_strided_slice %9 {offsets = [0, 0], sizes = [32, 128], strides = [1, 1]} : vector<32x384xf32> to vector<32x128xf32>
    %43 = arith.addf %41, %42 : vector<32x128xf32>
    %c0_16 = arith.constant 0 : index
    %c128_17 = arith.constant 128 : index
    %44 = vector.load %arg2[%c0_16, %c128_17] : memref<392x384xf32, #tpu.memory_space<vmem>>, vector<128x128xf32>
    %cst_18 = arith.constant dense<0.000000e+00> : vector<32x128xf32>
    %45 = tpu.matmul %43, %44, %cst_18 {dimension_numbers = #tpu.dot_dimension_numbers<[1], [0], [0], [1], [0, 0, 1, 1], [], []>} : vector<32x128xf32>, vector<128x128xf32>, vector<32x128xf32> -> vector<32x128xf32>
    %cst_19 = arith.constant dense<0.000000e+00> : vector<128xf32>
    %46 = vector.multi_reduction <add>, %45, %cst_19 [0] : vector<32x128xf32> to vector<128xf32>
    %47 = vector.shape_cast %46 : vector<128xf32> to vector<1x128xf32>
    %48 = arith.mulf %45, %45 : vector<32x128xf32>
    %cst_20 = arith.constant dense<0.000000e+00> : vector<128xf32>
    %49 = vector.multi_reduction <add>, %48, %cst_20 [0] : vector<32x128xf32> to vector<128xf32>
    %50 = vector.shape_cast %49 : vector<128xf32> to vector<1x128xf32>
    %cst_21 = arith.constant 3.125000e-02 : f32
    %51 = vector.broadcast %cst_21 : f32 to vector<1x128xf32>
    %52 = arith.mulf %47, %51 : vector<1x128xf32>
    %cst_22 = arith.constant 3.125000e-02 : f32
    %53 = vector.broadcast %cst_22 : f32 to vector<1x128xf32>
    %54 = arith.mulf %50, %53 : vector<1x128xf32>
    %55 = arith.mulf %52, %52 : vector<1x128xf32>
    %56 = arith.subf %54, %55 : vector<1x128xf32>
    %cst_23 = arith.constant 0.000000e+00 : f32
    %57 = vector.broadcast %cst_23 : f32 to vector<1x128xf32>
    %58 = arith.maximumf %56, %57 : vector<1x128xf32>
    %59 = vector.extract_strided_slice %3 {offsets = [0, 128], sizes = [1, 128], strides = [1, 1]} : vector<1x384xf32> to vector<1x128xf32>
    %60 = vector.extract_strided_slice %4 {offsets = [0, 128], sizes = [1, 128], strides = [1, 1]} : vector<1x384xf32> to vector<1x128xf32>
    %cst_24 = arith.constant 9.99999974E-6 : f32
    %61 = vector.broadcast %cst_24 : f32 to vector<1x128xf32>
    %62 = arith.addf %58, %61 : vector<1x128xf32>
    %63 = math.rsqrt %62 : vector<1x128xf32>
    %64 = arith.mulf %59, %63 : vector<1x128xf32>
    %65 = arith.mulf %52, %64 : vector<1x128xf32>
    %66 = arith.subf %60, %65 : vector<1x128xf32>
    %67 = vector.broadcast %64 : vector<1x128xf32> to vector<32x128xf32>
    %68 = arith.mulf %45, %67 : vector<32x128xf32>
    %69 = vector.broadcast %66 : vector<1x128xf32> to vector<32x128xf32>
    %70 = arith.addf %68, %69 : vector<32x128xf32>
    %cst_25 = arith.constant 0.000000e+00 : f32
    %71 = vector.broadcast %cst_25 : f32 to vector<32x128xf32>
    %72 = arith.cmpf ogt, %70, %71 : vector<32x128xf32>
    %cst_26 = arith.constant 2.000000e-01 : f32
    %73 = vector.broadcast %cst_26 : f32 to vector<32x128xf32>
    %74 = arith.mulf %73, %70 : vector<32x128xf32>
    %75 = arith.select %72, %70, %74 : vector<32x128xi1>, vector<32x128xf32>
    %76 = vector.extract_strided_slice %9 {offsets = [0, 128], sizes = [32, 128], strides = [1, 1]} : vector<32x384xf32> to vector<32x128xf32>
    %77 = arith.addf %75, %76 : vector<32x128xf32>
    %c0_27 = arith.constant 0 : index
    %c256 = arith.constant 256 : index
    %78 = vector.load %arg2[%c0_27, %c256] : memref<392x384xf32, #tpu.memory_space<vmem>>, vector<128x128xf32>
    %cst_28 = arith.constant dense<0.000000e+00> : vector<32x128xf32>
    %79 = tpu.matmul %77, %78, %cst_28 {dimension_numbers = #tpu.dot_dimension_numbers<[1], [0], [0], [1], [0, 0, 1, 1], [], []>} : vector<32x128xf32>, vector<128x128xf32>, vector<32x128xf32> -> vector<32x128xf32>
    %cst_29 = arith.constant dense<0.000000e+00> : vector<128xf32>
    %80 = vector.multi_reduction <add>, %79, %cst_29 [0] : vector<32x128xf32> to vector<128xf32>
    %81 = vector.shape_cast %80 : vector<128xf32> to vector<1x128xf32>
    %82 = arith.mulf %79, %79 : vector<32x128xf32>
    %cst_30 = arith.constant dense<0.000000e+00> : vector<128xf32>
    %83 = vector.multi_reduction <add>, %82, %cst_30 [0] : vector<32x128xf32> to vector<128xf32>
    %84 = vector.shape_cast %83 : vector<128xf32> to vector<1x128xf32>
    %cst_31 = arith.constant 3.125000e-02 : f32
    %85 = vector.broadcast %cst_31 : f32 to vector<1x128xf32>
    %86 = arith.mulf %81, %85 : vector<1x128xf32>
    %cst_32 = arith.constant 3.125000e-02 : f32
    %87 = vector.broadcast %cst_32 : f32 to vector<1x128xf32>
    %88 = arith.mulf %84, %87 : vector<1x128xf32>
    %89 = arith.mulf %86, %86 : vector<1x128xf32>
    %90 = arith.subf %88, %89 : vector<1x128xf32>
    %cst_33 = arith.constant 0.000000e+00 : f32
    %91 = vector.broadcast %cst_33 : f32 to vector<1x128xf32>
    %92 = arith.maximumf %90, %91 : vector<1x128xf32>
    %93 = vector.extract_strided_slice %3 {offsets = [0, 256], sizes = [1, 128], strides = [1, 1]} : vector<1x384xf32> to vector<1x128xf32>
    %94 = vector.extract_strided_slice %4 {offsets = [0, 256], sizes = [1, 128], strides = [1, 1]} : vector<1x384xf32> to vector<1x128xf32>
    %cst_34 = arith.constant 9.99999974E-6 : f32
    %95 = vector.broadcast %cst_34 : f32 to vector<1x128xf32>
    %96 = arith.addf %92, %95 : vector<1x128xf32>
    %97 = math.rsqrt %96 : vector<1x128xf32>
    %98 = arith.mulf %93, %97 : vector<1x128xf32>
    %99 = arith.mulf %86, %98 : vector<1x128xf32>
    %100 = arith.subf %94, %99 : vector<1x128xf32>
    %101 = vector.broadcast %98 : vector<1x128xf32> to vector<32x128xf32>
    %102 = arith.mulf %79, %101 : vector<32x128xf32>
    %103 = vector.broadcast %100 : vector<1x128xf32> to vector<32x128xf32>
    %104 = arith.addf %102, %103 : vector<32x128xf32>
    %cst_35 = arith.constant 0.000000e+00 : f32
    %105 = vector.broadcast %cst_35 : f32 to vector<32x128xf32>
    %106 = arith.cmpf ogt, %104, %105 : vector<32x128xf32>
    %cst_36 = arith.constant 2.000000e-01 : f32
    %107 = vector.broadcast %cst_36 : f32 to vector<32x128xf32>
    %108 = arith.mulf %107, %104 : vector<32x128xf32>
    %109 = arith.select %106, %104, %108 : vector<32x128xi1>, vector<32x128xf32>
    %110 = vector.extract_strided_slice %9 {offsets = [0, 256], sizes = [32, 128], strides = [1, 1]} : vector<32x384xf32> to vector<32x128xf32>
    %111 = arith.addf %109, %110 : vector<32x128xf32>
    %c256_37 = arith.constant 256 : index
    %c0_38 = arith.constant 0 : index
    %112 = vector.load %arg2[%c256_37, %c0_38] : memref<392x384xf32, #tpu.memory_space<vmem>>, vector<128x128xf32>
    %cst_39 = arith.constant dense<0.000000e+00> : vector<32x128xf32>
    %113 = tpu.matmul %111, %112, %cst_39 {dimension_numbers = #tpu.dot_dimension_numbers<[1], [0], [0], [1], [0, 0, 1, 1], [], []>} : vector<32x128xf32>, vector<128x128xf32>, vector<32x128xf32> -> vector<32x128xf32>
    %c0_40 = arith.constant 0 : index
    %c0_41 = arith.constant 0 : index
    %114 = vector.load %arg3[%c0_40, %c0_41] : memref<32x128xf32, #tpu.memory_space<vmem>>, vector<32x128xf32>
    tpu.vector_store %arg3[%c0_40, %c0_41], %113 {strides = array<i32>} : memref<32x128xf32, #tpu.memory_space<vmem>>, vector<32x128xf32>,
    return
  }
}

</mosaic_0001>

<llo_original>
// kernel: generator_forward.1
$region0: #{generator_forward.1}
  #allocation0 [shape = 'u32[]', space=smem, size = 0x4, offset = 0x4, fixed_abs, tag = 'smem constant byte address 0x4 - core index']
  #allocation1 [shape = 'u32[144,128]{1,0:T(1,128)}', space=vmem, size = 0x12000, scoped, tag = 'internal scratch']
  %s0 = inlined_call_operand.vmem [shape: f32[32,128], index: 0, kind: input, shape index: {}]
  %s1 = inlined_call_operand.vmem [shape: f32[32,128], index: 1, kind: input, shape index: {}]
  %s2 = inlined_call_operand.hbm [shape: f32[392,384], index: 2, kind: input, shape index: {}]
  %s3 = inlined_call_operand.vmem [shape: f32[32,128], index: 3, kind: output, shape index: {}]
  %s4 = sld [smem:[#allocation0]]
  $region26: #{generator_forward.1} parent=0
    _
  %s6 = ssub.s32 1, %s4
  %s7 = scalar_select 0, %s6, %s4
  $region1: #{generator_forward.1} parent=0
    #allocation2 [shape = 'u8[602112]{0}', space=vmem, size = 0x93000, scoped, tag = 'input window, operand 2, single buffered']
    #allocation3 [shape = 's32[1]{0}', space=sflag, size = 0x4, scoped, tag = 'scoped memory for generator_forward.1']
    %8 = vsyncpa [#allocation3], 0
    // Predicated region
    $region2: #{generator_forward.1} parent=1 // pred_check
      _
    $region3: #{generator_forward.1} parent=1 // pred_check_branch
      %10 = sbr.rel (0) target = $region5
    $region4: #{generator_forward.1} parent=1 // pred_region
      _
    $region5: #{generator_forward.1} parent=1 // pred_fallthru
      _
    // Predicated region
    $region6: #{generator_forward.1} parent=1 // pred_check
      _
    $region7: #{generator_forward.1} parent=1 // pred_check_branch
      %12 = sbr.rel (0) target = $region9
    $region8: #{generator_forward.1} parent=1 // pred_region
      _
    $region9: #{generator_forward.1} parent=1 // pred_fallthru
      _
    // Predicated region
    $region10: #{generator_forward.1} parent=1 // pred_check
      _
    $region11: #{generator_forward.1} parent=1 // pred_check_branch
      %14 = sbr.rel (0) target = $region13
    $region12: #{generator_forward.1} parent=1 // pred_region
      %s16 = ssub.s32 18816, 18816
      %17 = vsyncadd [#allocation3], %s16
      %s18 = sshll.u32 [#allocation2], 4
      %s19 = int_to_ptr.vmem [resolvable:$true] %s18
      %24 = dma.hbm_to_vmem [thread:$0]  %s2, 18816, %s19, [#allocation3], 384, 384, 24
    $region13: #{generator_forward.1} parent=1 // pred_fallthru
      _
    // Predicated region
    $region14: #{generator_forward.1} parent=1 // pred_check
      _
    $region15: #{generator_forward.1} parent=1 // pred_check_branch
      %26 = sbr.rel (0) target = $region17
    $region16: #{generator_forward.1} parent=1 // pred_region
      %27 = dma.done [#allocation3], 18816
    $region17: #{generator_forward.1} parent=1 // pred_fallthru
      _
    %v28 = vld [vmem:[%s0] sm:$0xff]
    %v29 = vld [vmem:[%s0 + $0x8] sm:$0xff]
    %v30 = vld [vmem:[%s0 + $0x10] sm:$0xff]
    %v31 = vld [vmem:[%s0 + $0x18] sm:$0xff]
    %v32 = vld [vmem:[%s1] sm:$0xff]
    %v33 = vld [vmem:[%s1 + $0x8] sm:$0xff]
    %v34 = vld [vmem:[%s1 + $0x10] sm:$0xff]
    %v35 = vld [vmem:[%s1 + $0x18] sm:$0xff]
    %v36 = vld [vmem:[#allocation2 + $0x480] sm:$0xff]
    %v37 = vld [vmem:[#allocation2 + $0x488] sm:$0xff]
    %v38 = vld [vmem:[#allocation2 + $0x490] sm:$0xff]
    %v39 = vld [vmem:[#allocation2 + $0x180] sm:$0xff]
    %v40 = vld [vmem:[#allocation2 + $0x188] sm:$0xff]
    %v41 = vld [vmem:[#allocation2 + $0x190] sm:$0xff]
    %v42 = vld [vmem:[#allocation2 + $0x198] sm:$0xff]
    %v43 = vld [vmem:[#allocation2 + $0x1a0] sm:$0xff]
    %v44 = vld [vmem:[#allocation2 + $0x1a8] sm:$0xff]
    %v45 = vld [vmem:[#allocation2 + $0x1b0] sm:$0xff]
    %v46 = vld [vmem:[#allocation2 + $0x1b8] sm:$0xff]
    %v47 = vld [vmem:[#allocation2 + $0x1c0] sm:$0xff]
    %v48 = vld [vmem:[#allocation2 + $0x1c8] sm:$0xff]
    %v49 = vld [vmem:[#allocation2 + $0x1d0] sm:$0xff]
    %v50 = vld [vmem:[#allocation2 + $0x1d8] sm:$0xff]
    %v51 = vld [vmem:[#allocation2 + $0x1e0] sm:$0xff]
    %v52 = vld [vmem:[#allocation2 + $0x1e8] sm:$0xff]
    %v53 = vld [vmem:[#allocation2 + $0x1f0] sm:$0xff]
    %v54 = vld [vmem:[#allocation2 + $0x1f8] sm:$0xff]
    %v55 = vld [vmem:[#allocation2 + $0x200] sm:$0xff]
    %v56 = vld [vmem:[#allocation2 + $0x208] sm:$0xff]
    %v57 = vld [vmem:[#allocation2 + $0x210] sm:$0xff]
    %v58 = vld [vmem:[#allocation2 + $0x218] sm:$0xff]
    %v59 = vld [vmem:[#allocation2 + $0x220] sm:$0xff]
    %v60 = vld [vmem:[#allocation2 + $0x228] sm:$0xff]
    %v61 = vld [vmem:[#allocation2 + $0x230] sm:$0xff]
    %v62 = vld [vmem:[#allocation2 + $0x238] sm:$0xff]
    %v63 = vld [vmem:[#allocation2 + $0x240] sm:$0xff]
    %v64 = vld [vmem:[#allocation2 + $0x248] sm:$0xff]
    %v65 = vld [vmem:[#allocation2 + $0x250] sm:$0xff]
    %v66 = vld [vmem:[#allocation2 + $0x258] sm:$0xff]
    %v67 = vld [vmem:[#allocation2 + $0x260] sm:$0xff]
    %v68 = vld [vmem:[#allocation2 + $0x268] sm:$0xff]
    %v69 = vld [vmem:[#allocation2 + $0x270] sm:$0xff]
    %v70 = vld [vmem:[#allocation2 + $0x278] sm:$0xff]
    %v71 = vld [vmem:[#allocation2 + $0x280] sm:$0xff]
    %v72 = vld [vmem:[#allocation2 + $0x288] sm:$0xff]
    %v73 = vld [vmem:[#allocation2 + $0x290] sm:$0xff]
    %v74 = vld [vmem:[#allocation2 + $0x298] sm:$0xff]
    %v75 = vld [vmem:[#allocation2 + $0x2a0] sm:$0xff]
    %v76 = vld [vmem:[#allocation2 + $0x2a8] sm:$0xff]
    %v77 = vld [vmem:[#allocation2 + $0x2b0] sm:$0xff]
    %v78 = vld [vmem:[#allocation2 + $0x2b8] sm:$0xff]
    %v79 = vld [vmem:[#allocation2 + $0x2c0] sm:$0xff]
    %v80 = vld [vmem:[#allocation2 + $0x2c8] sm:$0xff]
    %v81 = vld [vmem:[#allocation2 + $0x2d0] sm:$0xff]
    %v82 = vld [vmem:[#allocation2 + $0x2d8] sm:$0xff]
    %v83 = vld [vmem:[#allocation2 + $0x2e0] sm:$0xff]
    %v84 = vld [vmem:[#allocation2 + $0x2e8] sm:$0xff]
    %v85 = vld [vmem:[#allocation2 + $0x2f0] sm:$0xff]
    %v86 = vld [vmem:[#allocation2 + $0x2f8] sm:$0xff]
    %v87 = vlaneseq
    %v88 = vshrl.u32 %v87, 7
    %v89 = vsub.s32 2, %v88
    %v90 = vrot.slane %v36, %v89
    %v91 = vlaneseq
    %v92 = vshrl.u32 %v91, 7
    %v93 = vsub.s32 2, %v92
    %v94 = vrot.slane %v37, %v93
    %v95 = vlaneseq
    %v96 = vshrl.u32 %v95, 7
    %v97 = vsub.s32 2, %v96
    %v98 = vrot.slane %v38, %v97
    %99 = vmatprep.subr.mxu0 %v40
    %100 = vmatpush1.msra.mxu0 %v39
    %101 = vmatprep.subr.mxu0 %v43
    %102 = vmatpush1.msra.mxu0 %v42
    %103 = vmatprep.subr.mxu0 %v46
    %104 = vmatpush1.msra.mxu0 %v45
    %105 = vmatprep.subr.mxu0 %v49
    %106 = vmatpush1.msra.mxu0 %v48
    %107 = vmatprep.subr.mxu0 %v52
    %108 = vmatpush1.msra.mxu0 %v51
    %109 = vmatprep.subr.mxu0 %v55
    %110 = vmatpush1.msra.mxu0 %v54
    %111 = vmatprep.subr.mxu0 %v58
    %112 = vmatpush1.msra.mxu0 %v57
    %113 = vmatprep.subr.mxu0 %v61
    %114 = vmatpush1.msra.mxu0 %v60
    %115 = vmatprep.subr.mxu0 %v64
    %116 = vmatpush1.msra.mxu0 %v63
    %117 = vmatprep.subr.mxu0 %v67
    %118 = vmatpush1.msra.mxu0 %v66
    %119 = vmatprep.subr.mxu0 %v70
    %120 = vmatpush1.msra.mxu0 %v69
    %121 = vmatprep.subr.mxu0 %v73
    %122 = vmatpush1.msra.mxu0 %v72
    %123 = vmatprep.subr.mxu0 %v76
    %124 = vmatpush1.msra.mxu0 %v75
    %125 = vmatprep.subr.mxu0 %v79
    %126 = vmatpush1.msra.mxu0 %v78
    %127 = vmatprep.subr.mxu0 %v82
    %128 = vmatpush1.msra.mxu0 %v81
    %129 = vmatprep.subr.mxu0 %v85
    %130 = vmatpush1.msra.mxu0 %v84
    %131 = vmatprep.subr.mxu0 0.0
    %132 = vmatpush1.msra.mxu0 0.0
    %133 = vmatprep.subr.mxu0 0.0
    %134 = vmatpush1.msra.mxu0 0.0
    %135 = vmatprep.subr.mxu0 0.0
    %136 = vmatpush1.msra.mxu0 0.0
    %137 = vmatprep.subr.mxu0 0.0
    %138 = vmatpush1.msra.mxu0 0.0
    %139 = vmatprep.subr.mxu0 0.0
    %140 = vmatpush1.msra.mxu0 0.0
    %141 = vmatprep.subr.mxu0 0.0
    %142 = vmatpush1.msra.mxu0 0.0
    %143 = vmatprep.subr.mxu0 0.0
    %144 = vmatpush1.msra.mxu0 0.0
    %145 = vmatprep.subr.mxu0 0.0
    %146 = vmatpush1.msra.mxu0 0.0
    %147 = vmatprep.subr.mxu0 0.0
    %148 = vmatpush1.msra.mxu0 0.0
    %149 = vmatprep.subr.mxu0 0.0
    %150 = vmatpush1.msra.mxu0 0.0
    %151 = vmatprep.subr.mxu0 0.0
    %152 = vmatpush1.msra.mxu0 0.0
    %153 = vmatprep.subr.mxu0 0.0
    %154 = vmatpush1.msra.mxu0 0.0
    %155 = vmatprep.subr.mxu0 0.0
    %156 = vmatpush1.msra.mxu0 0.0
    %157 = vmatprep.subr.mxu0 0.0
    %158 = vmatpush1.msra.mxu0 0.0
    %159 = vmatprep.subr.mxu0 0.0
    %160 = vmatpush1.msra.mxu0 0.0
    %161 = vmatprep.subr.mxu0 0.0
    %162 = vmatpush1.msra.mxu0 0.0
    %163 = vmatprep.mubr.f32.mxu0 0.0
    %164 = vmatmul.mubr.f32.gmra.mrb[0].mxu0 %v32
    %v165 = vpop.f32.mrb[0].mxu0
    %v166 = vadd.f32 %v90, %v165
    %v167 = vpop.f32.mrb[0].mxu0
    %v168 = vadd.f32 %v94, %v167
    %169 = vmatprep.mubr.f32.mxu0 0.0
    %170 = vmatmul.mubr.f32.gmra.mrb[0].mxu0 %v33
    %v171 = vpop.f32.mrb[0].mxu0
    %v172 = vadd.f32 %v90, %v171
    %v173 = vpop.f32.mrb[0].mxu0
    %v174 = vadd.f32 %v94, %v173
    %175 = vmatprep.mubr.f32.mxu0 0.0
    %176 = vmatmul.mubr.f32.gmra.mrb[0].mxu0 %v34
    %v177 = vpop.f32.mrb[0].mxu0
    %v178 = vadd.f32 %v90, %v177
    %v179 = vpop.f32.mrb[0].mxu0
    %v180 = vadd.f32 %v94, %v179
    %181 = vmatprep.mubr.f32.mxu0 0.0
    %182 = vmatmul.mubr.f32.gmra.mrb[0].mxu0 %v35
    %v183 = vpop.f32.mrb[0].mxu0
    %v184 = vadd.f32 %v90, %v183
    %v185 = vpop.f32.mrb[0].mxu0
    %v186 = vadd.f32 %v94, %v185
    %187 = vdwg.mxu0
    %188 = vmatprep.subr.mxu0 0.0
    %189 = vmatpush1.msra.mxu0 %v41
    %190 = vmatprep.subr.mxu0 0.0
    %191 = vmatpush1.msra.mxu0 %v44
    %192 = vmatprep.subr.mxu0 0.0
    %193 = vmatpush1.msra.mxu0 %v47
    %194 = vmatprep.subr.mxu0 0.0
    %195 = vmatpush1.msra.mxu0 %v50
    %196 = vmatprep.subr.mxu0 0.0
    %197 = vmatpush1.msra.mxu0 %v53
    %198 = vmatprep.subr.mxu0 0.0
    %199 = vmatpush1.msra.mxu0 %v56
    %200 = vmatprep.subr.mxu0 0.0
    %201 = vmatpush1.msra.mxu0 %v59
    %202 = vmatprep.subr.mxu0 0.0
    %203 = vmatpush1.msra.mxu0 %v62
    %204 = vmatprep.subr.mxu0 0.0
    %205 = vmatpush1.msra.mxu0 %v65
    %206 = vmatprep.subr.mxu0 0.0
    %207 = vmatpush1.msra.mxu0 %v68
    %208 = vmatprep.subr.mxu0 0.0
    %209 = vmatpush1.msra.mxu0 %v71
    %210 = vmatprep.subr.mxu0 0.0
    %211 = vmatpush1.msra.mxu0 %v74
    %212 = vmatprep.subr.mxu0 0.0
    %213 = vmatpush1.msra.mxu0 %v77
    %214 = vmatprep.subr.mxu0 0.0
    %215 = vmatpush1.msra.mxu0 %v80
    %216 = vmatprep.subr.mxu0 0.0
    %217 = vmatpush1.msra.mxu0 %v83
    %218 = vmatprep.subr.mxu0 0.0
    %219 = vmatpush1.msra.mxu0 %v86
    %220 = vmatprep.subr.mxu0 0.0
    %221 = vmatpush1.msra.mxu0 0.0
    %222 = vmatprep.subr.mxu0 0.0
    %223 = vmatpush1.msra.mxu0 0.0
    %224 = vmatprep.subr.mxu0 0.0
    %225 = vmatpush1.msra.mxu0 0.0
    %226 = vmatprep.subr.mxu0 0.0
    %227 = vmatpush1.msra.mxu0 0.0
    %228 = vmatprep.subr.mxu0 0.0
    %229 = vmatpush1.msra.mxu0 0.0
    %230 = vmatprep.subr.mxu0 0.0
    %231 = vmatpush1.msra.mxu0 0.0
    %232 = vmatprep.subr.mxu0 0.0
    %233 = vmatpush1.msra.mxu0 0.0
    %234 = vmatprep.subr.mxu0 0.0
    %235 = vmatpush1.msra.mxu0 0.0
    %236 = vmatprep.subr.mxu0 0.0
    %237 = vmatpush1.msra.mxu0 0.0
    %238 = vmatprep.subr.mxu0 0.0
    %239 = vmatpush1.msra.mxu0 0.0
    %240 = vmatprep.subr.mxu0 0.0
    %241 = vmatpush1.msra.mxu0 0.0
    %242 = vmatprep.subr.mxu0 0.0
    %243 = vmatpush1.msra.mxu0 0.0
    %244 = vmatprep.subr.mxu0 0.0
    %245 = vmatpush1.msra.mxu0 0.0
    %246 = vmatprep.subr.mxu0 0.0
    %247 = vmatpush1.msra.mxu0 0.0
    %248 = vmatprep.subr.mxu0 0.0
    %249 = vmatpush1.msra.mxu0 0.0
    %250 = vmatprep.subr.mxu0 0.0
    %251 = vmatpush1.msra.mxu0 0.0
    %252 = vmatprep.mubr.f32.mxu0 0.0
    %253 = vmatmul.mubr.f32.gmra.mrb[0].mxu0 %v32
    %v254 = vpop.f32.mrb[0].mxu0
    %v255 = vadd.f32 %v98, %v254
    %v256 = vpop.f32.mrb[0].mxu0
    %257 = vmatprep.mubr.f32.mxu0 0.0
    %258 = vmatmul.mubr.f32.gmra.mrb[0].mxu0 %v33
    %v259 = vpop.f32.mrb[0].mxu0
    %v260 = vadd.f32 %v98, %v259
    %v261 = vpop.f32.mrb[0].mxu0
    %262 = vmatprep.mubr.f32.mxu0 0.0
    %263 = vmatmul.mubr.f32.gmra.mrb[0].mxu0 %v34
    %v264 = vpop.f32.mrb[0].mxu0
    %v265 = vadd.f32 %v98, %v264
    %v266 = vpop.f32.mrb[0].mxu0
    %267 = vmatprep.mubr.f32.mxu0 0.0
    %268 = vmatmul.mubr.f32.gmra.mrb[0].mxu0 %v35
    %v269 = vpop.f32.mrb[0].mxu0
    %v270 = vadd.f32 %v98, %v269
    %v271 = vpop.f32.mrb[0].mxu0
    %272 = vdwg.mxu0
    %v273 = vld [vmem:[#allocation2] sm:$0xff]
    %v274 = vld [vmem:[#allocation2 + $0x18] sm:$0xff]
    %v275 = vld [vmem:[#allocation2 + $0x30] sm:$0xff]
    %v276 = vld [vmem:[#allocation2 + $0x48] sm:$0xff]
    %v277 = vld [vmem:[#allocation2 + $0x60] sm:$0xff]
    %v278 = vld [vmem:[#allocation2 + $0x78] sm:$0xff]
    %v279 = vld [vmem:[#allocation2 + $0x90] sm:$0xff]
    %v280 = vld [vmem:[#allocation2 + $0xa8] sm:$0xff]
    %v281 = vld [vmem:[#allocation2 + $0xc0] sm:$0xff]
    %v282 = vld [vmem:[#allocation2 + $0xd8] sm:$0xff]
    %v283 = vld [vmem:[#allocation2 + $0xf0] sm:$0xff]
    %v284 = vld [vmem:[#allocation2 + $0x108] sm:$0xff]
    %v285 = vld [vmem:[#allocation2 + $0x120] sm:$0xff]
    %v286 = vld [vmem:[#allocation2 + $0x138] sm:$0xff]
    %v287 = vld [vmem:[#allocation2 + $0x150] sm:$0xff]
    %v288 = vld [vmem:[#allocation2 + $0x168] sm:$0xff]
    %289 = vmatprep.subr.mxu0 0.0
    %290 = vmatpush1.msra.mxu0 %v273
    %291 = vmatprep.subr.mxu0 0.0
    %292 = vmatpush1.msra.mxu0 %v274
    %293 = vmatprep.subr.mxu0 0.0
    %294 = vmatpush1.msra.mxu0 %v275
    %295 = vmatprep.subr.mxu0 0.0
    %296 = vmatpush1.msra.mxu0 %v276
    %297 = vmatprep.subr.mxu0 0.0
    %298 = vmatpush1.msra.mxu0 %v277
    %299 = vmatprep.subr.mxu0 0.0
    %300 = vmatpush1.msra.mxu0 %v278
    %301 = vmatprep.subr.mxu0 0.0
    %302 = vmatpush1.msra.mxu0 %v279
    %303 = vmatprep.subr.mxu0 0.0
    %304 = vmatpush1.msra.mxu0 %v280
    %305 = vmatprep.subr.mxu0 0.0
    %306 = vmatpush1.msra.mxu0 %v281
    %307 = vmatprep.subr.mxu0 0.0
    %308 = vmatpush1.msra.mxu0 %v282
    %309 = vmatprep.subr.mxu0 0.0
    %310 = vmatpush1.msra.mxu0 %v283
    %311 = vmatprep.subr.mxu0 0.0
    %312 = vmatpush1.msra.mxu0 %v284
    %313 = vmatprep.subr.mxu0 0.0
    %314 = vmatpush1.msra.mxu0 %v285
    %315 = vmatprep.subr.mxu0 0.0
    %316 = vmatpush1.msra.mxu0 %v286
    %317 = vmatprep.subr.mxu0 0.0
    %318 = vmatpush1.msra.mxu0 %v287
    %319 = vmatprep.subr.mxu0 0.0
    %320 = vmatpush1.msra.mxu0 %v288
    %321 = vmatprep.subr.mxu0 0.0
    %322 = vmatpush1.msra.mxu0 0.0
    %323 = vmatprep.subr.mxu0 0.0
    %324 = vmatpush1.msra.mxu0 0.0
    %325 = vmatprep.subr.mxu0 0.0
    %326 = vmatpush1.msra.mxu0 0.0
    %327 = vmatprep.subr.mxu0 0.0
    %328 = vmatpush1.msra.mxu0 0.0
    %329 = vmatprep.subr.mxu0 0.0
    %330 = vmatpush1.msra.mxu0 0.0
    %331 = vmatprep.subr.mxu0 0.0
    %332 = vmatpush1.msra.mxu0 0.0
    %333 = vmatprep.subr.mxu0 0.0
    %334 = vmatpush1.msra.mxu0 0.0
    %335 = vmatprep.subr.mxu0 0.0
    %336 = vmatpush1.msra.mxu0 0.0
    %337 = vmatprep.subr.mxu0 0.0
    %338 = vmatpush1.msra.mxu0 0.0
    %339 = vmatprep.subr.mxu0 0.0
    %340 = vmatpush1.msra.mxu0 0.0
    %341 = vmatprep.subr.mxu0 0.0
    %342 = vmatpush1.msra.mxu0 0.0
    %343 = vmatprep.subr.mxu0 0.0
    %344 = vmatpush1.msra.mxu0 0.0
    %345 = vmatprep.subr.mxu0 0.0
    %346 = vmatpush1.msra.mxu0 0.0
    %347 = vmatprep.subr.mxu0 0.0
    %348 = vmatpush1.msra.mxu0 0.0
    %349 = vmatprep.subr.mxu0 0.0
    %350 = vmatpush1.msra.mxu0 0.0
    %351 = vmatprep.subr.mxu0 0.0
    %352 = vmatpush1.msra.mxu0 0.0
    %353 = vmatprep.mubr.f32.mxu0 0.0
    %354 = vmatmul.mubr.f32.gmra.mrb[0].mxu0 %v28
    %v355 = vpop.f32.mrb[0].mxu0
    %v356 = vadd.f32 0.0, %v355
    %v357 = vpop.f32.mrb[0].mxu0
    %358 = vmatprep.mubr.f32.mxu0 0.0
    %359 = vmatmul.mubr.f32.gmra.mrb[0].mxu0 %v29
    %v360 = vpop.f32.mrb[0].mxu0
    %v361 = vadd.f32 0.0, %v360
    %v362 = vpop.f32.mrb[0].mxu0
    %363 = vmatprep.mubr.f32.mxu0 0.0
    %364 = vmatmul.mubr.f32.gmra.mrb[0].mxu0 %v30
    %v365 = vpop.f32.mrb[0].mxu0
    %v366 = vadd.f32 0.0, %v365
    %v367 = vpop.f32.mrb[0].mxu0
    %368 = vmatprep.mubr.f32.mxu0 0.0
    %369 = vmatmul.mubr.f32.gmra.mrb[0].mxu0 %v31
    %v370 = vpop.f32.mrb[0].mxu0
    %v371 = vadd.f32 0.0, %v370
    %v372 = vpop.f32.mrb[0].mxu0
    %373 = vdwg.mxu0
    %v374 = vadd.f32 %v356, %v361
    %v375 = vadd.f32 %v374, %v366
    %v376 = vadd.f32 %v375, %v371
    %v377 = vrot.slane %v376, 4
    %v378 = vadd.f32 %v376, %v377
    %v379 = vrot.slane %v378, 2
    %v380 = vadd.f32 %v378, %v379
    %v381 = vrot.slane %v380, 1
    %v382 = vadd.f32 %v380, %v381
    %v383 = vmul.f32 %v356, %v356
    %v384 = vmul.f32 %v361, %v361
    %v385 = vmul.f32 %v366, %v366
    %v386 = vmul.f32 %v371, %v371
    %v387 = vadd.f32 %v383, %v384
    %v388 = vadd.f32 %v387, %v385
    %v389 = vadd.f32 %v388, %v386
    %v390 = vrot.slane %v389, 4
    %v391 = vadd.f32 %v389, %v390
    %v392 = vrot.slane %v391, 2
    %v393 = vadd.f32 %v391, %v392
    %v394 = vrot.slane %v393, 1
    %v395 = vadd.f32 %v393, %v394
    %v396 = vmul.f32 %v382, 0.03125
    %v397 = vmul.f32 %v395, 0.03125
    %v398 = vmul.f32 %v396, %v396
    %v399 = vsub.f32 %v397, %v398
    %v400 = vmax.f32 %v399, 0.0
    %v401 = vadd.f32 %v400, 1e-05
    %v402 = vrsqrt.pop %v401
    %v403 = vmul.f32 %v36, %v402
    %v404 = vmul.f32 %v396, %v403
    %v406 = vrot.slane %v404, 7
    %v408 = vsub.f32 %v36, %v406
    %v409 = vlaneseq
    %v410 = vshrl.u32 %v409, 7
    %v411 = vsub.s32 0, %v410
    %v412 = vrot.slane %v403, %v411
    %v413 = vmul.f32 %v356, %v412
    %v414 = vmul.f32 %v361, %v412
    %v415 = vmul.f32 %v366, %v412
    %v416 = vmul.f32 %v371, %v412
    %v417 = vlaneseq
    %v418 = vshrl.u32 %v417, 7
    %v419 = vsub.s32 1, %v418
    %v420 = vrot.slane %v408, %v419
    %v421 = vadd.f32 %v413, %v420
    %v422 = vadd.f32 %v414, %v420
    %v423 = vadd.f32 %v415, %v420
    %v424 = vadd.f32 %v416, %v420
    %vm425 = vcmp.gt.f32.partialorder %v421, 0.0
    %vm426 = vcmp.gt.f32.partialorder %v422, 0.0
    %vm427 = vcmp.gt.f32.partialorder %v423, 0.0
    %vm428 = vcmp.gt.f32.partialorder %v424, 0.0
    %v429 = vmul.f32 %v421, 0.2
    %v430 = vmul.f32 %v422, 0.2
    %v431 = vmul.f32 %v423, 0.2
    %v432 = vmul.f32 %v424, 0.2
    %v433 = vsel %vm425, %v421, %v429
    %v434 = vsel %vm426, %v422, %v430
    %v435 = vsel %vm427, %v423, %v431
    %v436 = vsel %vm428, %v424, %v432
    %v437 = vadd.f32 %v433, %v166
    %v438 = vadd.f32 %v434, %v172
    %v439 = vadd.f32 %v435, %v178
    %v440 = vadd.f32 %v436, %v184
    %v441 = vld [vmem:[#allocation2 + $0x8] sm:$0xff]
    %v442 = vld [vmem:[#allocation2 + $0x20] sm:$0xff]
    %v443 = vld [vmem:[#allocation2 + $0x38] sm:$0xff]
    %v444 = vld [vmem:[#allocation2 + $0x50] sm:$0xff]
    %v445 = vld [vmem:[#allocation2 + $0x68] sm:$0xff]
    %v446 = vld [vmem:[#allocation2 + $0x80] sm:$0xff]
    %v447 = vld [vmem:[#allocation2 + $0x98] sm:$0xff]
    %v448 = vld [vmem:[#allocation2 + $0xb0] sm:$0xff]
    %v449 = vld [vmem:[#allocation2 + $0xc8] sm:$0xff]
    %v450 = vld [vmem:[#allocation2 + $0xe0] sm:$0xff]
    %v451 = vld [vmem:[#allocation2 + $0xf8] sm:$0xff]
    %v452 = vld [vmem:[#allocation2 + $0x110] sm:$0xff]
    %v453 = vld [vmem:[#allocation2 + $0x128] sm:$0xff]
    %v454 = vld [vmem:[#allocation2 + $0x140] sm:$0xff]
    %v455 = vld [vmem:[#allocation2 + $0x158] sm:$0xff]
    %v456 = vld [vmem:[#allocation2 + $0x170] sm:$0xff]
    %457 = vmatprep.subr.mxu0 0.0
    %458 = vmatpush1.msra.mxu0 %v441
    %459 = vmatprep.subr.mxu0 0.0
    %460 = vmatpush1.msra.mxu0 %v442
    %461 = vmatprep.subr.mxu0 0.0
    %462 = vmatpush1.msra.mxu0 %v443
    %463 = vmatprep.subr.mxu0 0.0
    %464 = vmatpush1.msra.mxu0 %v444
    %465 = vmatprep.subr.mxu0 0.0
    %466 = vmatpush1.msra.mxu0 %v445
    %467 = vmatprep.subr.mxu0 0.0
    %468 = vmatpush1.msra.mxu0 %v446
    %469 = vmatprep.subr.mxu0 0.0
    %470 = vmatpush1.msra.mxu0 %v447
    %471 = vmatprep.subr.mxu0 0.0
    %472 = vmatpush1.msra.mxu0 %v448
    %473 = vmatprep.subr.mxu0 0.0
    %474 = vmatpush1.msra.mxu0 %v449
    %475 = vmatprep.subr.mxu0 0.0
    %476 = vmatpush1.msra.mxu0 %v450
    %477 = vmatprep.subr.mxu0 0.0
    %478 = vmatpush1.msra.mxu0 %v451
    %479 = vmatprep.subr.mxu0 0.0
    %480 = vmatpush1.msra.mxu0 %v452
    %481 = vmatprep.subr.mxu0 0.0
    %482 = vmatpush1.msra.mxu0 %v453
    %483 = vmatprep.subr.mxu0 0.0
    %484 = vmatpush1.msra.mxu0 %v454
    %485 = vmatprep.subr.mxu0 0.0
    %486 = vmatpush1.msra.mxu0 %v455
    %487 = vmatprep.subr.mxu0 0.0
    %488 = vmatpush1.msra.mxu0 %v456
    %489 = vmatprep.subr.mxu0 0.0
    %490 = vmatpush1.msra.mxu0 0.0
    %491 = vmatprep.subr.mxu0 0.0
    %492 = vmatpush1.msra.mxu0 0.0
    %493 = vmatprep.subr.mxu0 0.0
    %494 = vmatpush1.msra.mxu0 0.0
    %495 = vmatprep.subr.mxu0 0.0
    %496 = vmatpush1.msra.mxu0 0.0
    %497 = vmatprep.subr.mxu0 0.0
    %498 = vmatpush1.msra.mxu0 0.0
    %499 = vmatprep.subr.mxu0 0.0
    %500 = vmatpush1.msra.mxu0 0.0
    %501 = vmatprep.subr.mxu0 0.0
    %502 = vmatpush1.msra.mxu0 0.0
    %503 = vmatprep.subr.mxu0 0.0
    %504 = vmatpush1.msra.mxu0 0.0
    %505 = vmatprep.subr.mxu0 0.0
    %506 = vmatpush1.msra.mxu0 0.0
    %507 = vmatprep.subr.mxu0 0.0
    %508 = vmatpush1.msra.mxu0 0.0
    %509 = vmatprep.subr.mxu0 0.0
    %510 = vmatpush1.msra.mxu0 0.0
    %511 = vmatprep.subr.mxu0 0.0
    %512 = vmatpush1.msra.mxu0 0.0
    %513 = vmatprep.subr.mxu0 0.0
    %514 = vmatpush1.msra.mxu0 0.0
    %515 = vmatprep.subr.mxu0 0.0
    %516 = vmatpush1.msra.mxu0 0.0
    %517 = vmatprep.subr.mxu0 0.0
    %518 = vmatpush1.msra.mxu0 0.0
    %519 = vmatprep.subr.mxu0 0.0
    %520 = vmatpush1.msra.mxu0 0.0
    %521 = vmatprep.mubr.f32.mxu0 0.0
    %522 = vmatmul.mubr.f32.gmra.mrb[0].mxu0 %v437
    %v523 = vpop.f32.mrb[0].mxu0
    %v524 = vadd.f32 0.0, %v523
    %v525 = vpop.f32.mrb[0].mxu0
    %526 = vmatprep.mubr.f32.mxu0 0.0
    %527 = vmatmul.mubr.f32.gmra.mrb[0].mxu0 %v438
    %v528 = vpop.f32.mrb[0].mxu0
    %v529 = vadd.f32 0.0, %v528
    %v530 = vpop.f32.mrb[0].mxu0
    %531 = vmatprep.mubr.f32.mxu0 0.0
    %532 = vmatmul.mubr.f32.gmra.mrb[0].mxu0 %v439
    %v533 = vpop.f32.mrb[0].mxu0
    %v534 = vadd.f32 0.0, %v533
    %v535 = vpop.f32.mrb[0].mxu0
    %536 = vmatprep.mubr.f32.mxu0 0.0
    %537 = vmatmul.mubr.f32.gmra.mrb[0].mxu0 %v440
    %v538 = vpop.f32.mrb[0].mxu0
    %v539 = vadd.f32 0.0, %v538
    %v540 = vpop.f32.mrb[0].mxu0
    %541 = vdwg.mxu0
    %v542 = vadd.f32 %v524, %v529
    %v543 = vadd.f32 %v542, %v534
    %v544 = vadd.f32 %v543, %v539
    %v545 = vrot.slane %v544, 4
    %v546 = vadd.f32 %v544, %v545
    %v547 = vrot.slane %v546, 2
    %v548 = vadd.f32 %v546, %v547
    %v549 = vrot.slane %v548, 1
    %v550 = vadd.f32 %v548, %v549
    %v551 = vmul.f32 %v524, %v524
    %v552 = vmul.f32 %v529, %v529
    %v553 = vmul.f32 %v534, %v534
    %v554 = vmul.f32 %v539, %v539
    %v555 = vadd.f32 %v551, %v552
    %v556 = vadd.f32 %v555, %v553
    %v557 = vadd.f32 %v556, %v554
    %v558 = vrot.slane %v557, 4
    %v559 = vadd.f32 %v557, %v558
    %v560 = vrot.slane %v559, 2
    %v561 = vadd.f32 %v559, %v560
    %v562 = vrot.slane %v561, 1
    %v563 = vadd.f32 %v561, %v562
    %v564 = vmul.f32 %v550, 0.03125
    %v565 = vmul.f32 %v563, 0.03125
    %v566 = vmul.f32 %v564, %v564
    %v567 = vsub.f32 %v565, %v566
    %v568 = vmax.f32 %v567, 0.0
    %v569 = vadd.f32 %v568, 1e-05
    %v570 = vrsqrt.pop %v569
    %v571 = vmul.f32 %v37, %v570
    %v572 = vmul.f32 %v564, %v571
    %v574 = vrot.slane %v572, 7
    %v576 = vsub.f32 %v37, %v574
    %v577 = vlaneseq
    %v578 = vshrl.u32 %v577, 7
    %v579 = vsub.s32 0, %v578
    %v580 = vrot.slane %v571, %v579
    %v581 = vmul.f32 %v524, %v580
    %v582 = vmul.f32 %v529, %v580
    %v583 = vmul.f32 %v534, %v580
    %v584 = vmul.f32 %v539, %v580
    %v585 = vlaneseq
    %v586 = vshrl.u32 %v585, 7
    %v587 = vsub.s32 1, %v586
    %v588 = vrot.slane %v576, %v587
    %v589 = vadd.f32 %v581, %v588
    %v590 = vadd.f32 %v582, %v588
    %v591 = vadd.f32 %v583, %v588
    %v592 = vadd.f32 %v584, %v588
    %vm593 = vcmp.gt.f32.partialorder %v589, 0.0
    %vm594 = vcmp.gt.f32.partialorder %v590, 0.0
    %vm595 = vcmp.gt.f32.partialorder %v591, 0.0
    %vm596 = vcmp.gt.f32.partialorder %v592, 0.0
    %v597 = vmul.f32 %v589, 0.2
    %v598 = vmul.f32 %v590, 0.2
    %v599 = vmul.f32 %v591, 0.2
    %v600 = vmul.f32 %v592, 0.2
    %v601 = vsel %vm593, %v589, %v597
    %v602 = vsel %vm594, %v590, %v598
    %v603 = vsel %vm595, %v591, %v599
    %v604 = vsel %vm596, %v592, %v600
    %v605 = vadd.f32 %v601, %v168
    %v606 = vadd.f32 %v602, %v174
    %v607 = vadd.f32 %v603, %v180
    %v608 = vadd.f32 %v604, %v186
    %v609 = vld [vmem:[#allocation2 + $0x10] sm:$0xff]
    %v610 = vld [vmem:[#allocation2 + $0x28] sm:$0xff]
    %v611 = vld [vmem:[#allocation2 + $0x40] sm:$0xff]
    %v612 = vld [vmem:[#allocation2 + $0x58] sm:$0xff]
    %v613 = vld [vmem:[#allocation2 + $0x70] sm:$0xff]
    %v614 = vld [vmem:[#allocation2 + $0x88] sm:$0xff]
    %v615 = vld [vmem:[#allocation2 + $0xa0] sm:$0xff]
    %v616 = vld [vmem:[#allocation2 + $0xb8] sm:$0xff]
    %v617 = vld [vmem:[#allocation2 + $0xd0] sm:$0xff]
    %v618 = vld [vmem:[#allocation2 + $0xe8] sm:$0xff]
    %v619 = vld [vmem:[#allocation2 + $0x100] sm:$0xff]
    %v620 = vld [vmem:[#allocation2 + $0x118] sm:$0xff]
    %v621 = vld [vmem:[#allocation2 + $0x130] sm:$0xff]
    %v622 = vld [vmem:[#allocation2 + $0x148] sm:$0xff]
    %v623 = vld [vmem:[#allocation2 + $0x160] sm:$0xff]
    %v624 = vld [vmem:[#allocation2 + $0x178] sm:$0xff]
    %625 = vmatprep.subr.mxu0 0.0
    %626 = vmatpush1.msra.mxu0 %v609
    %627 = vmatprep.subr.mxu0 0.0
    %628 = vmatpush1.msra.mxu0 %v610
    %629 = vmatprep.subr.mxu0 0.0
    %630 = vmatpush1.msra.mxu0 %v611
    %631 = vmatprep.subr.mxu0 0.0
    %632 = vmatpush1.msra.mxu0 %v612
    %633 = vmatprep.subr.mxu0 0.0
    %634 = vmatpush1.msra.mxu0 %v613
    %635 = vmatprep.subr.mxu0 0.0
    %636 = vmatpush1.msra.mxu0 %v614
    %637 = vmatprep.subr.mxu0 0.0
    %638 = vmatpush1.msra.mxu0 %v615
    %639 = vmatprep.subr.mxu0 0.0
    %640 = vmatpush1.msra.mxu0 %v616
    %641 = vmatprep.subr.mxu0 0.0
    %642 = vmatpush1.msra.mxu0 %v617
    %643 = vmatprep.subr.mxu0 0.0
    %644 = vmatpush1.msra.mxu0 %v618
    %645 = vmatprep.subr.mxu0 0.0
    %646 = vmatpush1.msra.mxu0 %v619
    %647 = vmatprep.subr.mxu0 0.0
    %648 = vmatpush1.msra.mxu0 %v620
    %649 = vmatprep.subr.mxu0 0.0
    %650 = vmatpush1.msra.mxu0 %v621
    %651 = vmatprep.subr.mxu0 0.0
    %652 = vmatpush1.msra.mxu0 %v622
    %653 = vmatprep.subr.mxu0 0.0
    %654 = vmatpush1.msra.mxu0 %v623
    %655 = vmatprep.subr.mxu0 0.0
    %656 = vmatpush1.msra.mxu0 %v624
    %657 = vmatprep.subr.mxu0 0.0
    %658 = vmatpush1.msra.mxu0 0.0
    %659 = vmatprep.subr.mxu0 0.0
    %660 = vmatpush1.msra.mxu0 0.0
    %661 = vmatprep.subr.mxu0 0.0
    %662 = vmatpush1.msra.mxu0 0.0
    %663 = vmatprep.subr.mxu0 0.0
    %664 = vmatpush1.msra.mxu0 0.0
    %665 = vmatprep.subr.mxu0 0.0
    %666 = vmatpush1.msra.mxu0 0.0
    %667 = vmatprep.subr.mxu0 0.0
    %668 = vmatpush1.msra.mxu0 0.0
    %669 = vmatprep.subr.mxu0 0.0
    %670 = vmatpush1.msra.mxu0 0.0
    %671 = vmatprep.subr.mxu0 0.0
    %672 = vmatpush1.msra.mxu0 0.0
    %673 = vmatprep.subr.mxu0 0.0
    %674 = vmatpush1.msra.mxu0 0.0
    %675 = vmatprep.subr.mxu0 0.0
    %676 = vmatpush1.msra.mxu0 0.0
    %677 = vmatprep.subr.mxu0 0.0
    %678 = vmatpush1.msra.mxu0 0.0
    %679 = vmatprep.subr.mxu0 0.0
    %680 = vmatpush1.msra.mxu0 0.0
    %681 = vmatprep.subr.mxu0 0.0
    %682 = vmatpush1.msra.mxu0 0.0
    %683 = vmatprep.subr.mxu0 0.0
    %684 = vmatpush1.msra.mxu0 0.0
    %685 = vmatprep.subr.mxu0 0.0
    %686 = vmatpush1.msra.mxu0 0.0
    %687 = vmatprep.subr.mxu0 0.0
    %688 = vmatpush1.msra.mxu0 0.0
    %689 = vmatprep.mubr.f32.mxu0 0.0
    %690 = vmatmul.mubr.f32.gmra.mrb[0].mxu0 %v605
    %v691 = vpop.f32.mrb[0].mxu0
    %v692 = vadd.f32 0.0, %v691
    %v693 = vpop.f32.mrb[0].mxu0
    %694 = vmatprep.mubr.f32.mxu0 0.0
    %695 = vmatmul.mubr.f32.gmra.mrb[0].mxu0 %v606
    %v696 = vpop.f32.mrb[0].mxu0
    %v697 = vadd.f32 0.0, %v696
    %v698 = vpop.f32.mrb[0].mxu0
    %699 = vmatprep.mubr.f32.mxu0 0.0
    %700 = vmatmul.mubr.f32.gmra.mrb[0].mxu0 %v607
    %v701 = vpop.f32.mrb[0].mxu0
    %v702 = vadd.f32 0.0, %v701
    %v703 = vpop.f32.mrb[0].mxu0
    %704 = vmatprep.mubr.f32.mxu0 0.0
    %705 = vmatmul.mubr.f32.gmra.mrb[0].mxu0 %v608
    %v706 = vpop.f32.mrb[0].mxu0
    %v707 = vadd.f32 0.0, %v706
    %v708 = vpop.f32.mrb[0].mxu0
    %709 = vdwg.mxu0
    %v710 = vadd.f32 %v692, %v697
    %v711 = vadd.f32 %v710, %v702
    %v712 = vadd.f32 %v711, %v707
    %v713 = vrot.slane %v712, 4
    %v714 = vadd.f32 %v712, %v713
    %v715 = vrot.slane %v714, 2
    %v716 = vadd.f32 %v714, %v715
    %v717 = vrot.slane %v716, 1
    %v718 = vadd.f32 %v716, %v717
    %v719 = vmul.f32 %v692, %v692
    %v720 = vmul.f32 %v697, %v697
    %v721 = vmul.f32 %v702, %v702
    %v722 = vmul.f32 %v707, %v707
    %v723 = vadd.f32 %v719, %v720
    %v724 = vadd.f32 %v723, %v721
    %v725 = vadd.f32 %v724, %v722
    %v726 = vrot.slane %v725, 4
    %v727 = vadd.f32 %v725, %v726
    %v728 = vrot.slane %v727, 2
    %v729 = vadd.f32 %v727, %v728
    %v730 = vrot.slane %v729, 1
    %v731 = vadd.f32 %v729, %v730
    %v732 = vmul.f32 %v718, 0.03125
    %v733 = vmul.f32 %v731, 0.03125
    %v734 = vmul.f32 %v732, %v732
    %v735 = vsub.f32 %v733, %v734
    %v736 = vmax.f32 %v735, 0.0
    %v737 = vadd.f32 %v736, 1e-05
    %v738 = vrsqrt.pop %v737
    %v739 = vmul.f32 %v38, %v738
    %v740 = vmul.f32 %v732, %v739
    %v742 = vrot.slane %v740, 7
    %v744 = vsub.f32 %v38, %v742
    %v745 = vlaneseq
    %v746 = vshrl.u32 %v745, 7
    %v747 = vsub.s32 0, %v746
    %v748 = vrot.slane %v739, %v747
    %v749 = vmul.f32 %v692, %v748
    %v750 = vmul.f32 %v697, %v748
    %v751 = vmul.f32 %v702, %v748
    %v752 = vmul.f32 %v707, %v748
    %v753 = vlaneseq
    %v754 = vshrl.u32 %v753, 7
    %v755 = vsub.s32 1, %v754
    %v756 = vrot.slane %v744, %v755
    %v757 = vadd.f32 %v749, %v756
    %v758 = vadd.f32 %v750, %v756
    %v759 = vadd.f32 %v751, %v756
    %v760 = vadd.f32 %v752, %v756
    %vm761 = vcmp.gt.f32.partialorder %v757, 0.0
    %vm762 = vcmp.gt.f32.partialorder %v758, 0.0
    %vm763 = vcmp.gt.f32.partialorder %v759, 0.0
    %vm764 = vcmp.gt.f32.partialorder %v760, 0.0
    %v765 = vmul.f32 %v757, 0.2
    %v766 = vmul.f32 %v758, 0.2
    %v767 = vmul.f32 %v759, 0.2
    %v768 = vmul.f32 %v760, 0.2
    %v769 = vsel %vm761, %v757, %v765
    %v770 = vsel %vm762, %v758, %v766
    %v771 = vsel %vm763, %v759, %v767
    %v772 = vsel %vm764, %v760, %v768
    %v773 = vadd.f32 %v769, %v255
    %v774 = vadd.f32 %v770, %v260
    %v775 = vadd.f32 %v771, %v265
    %v776 = vadd.f32 %v772, %v270
    %v777 = vld [vmem:[#allocation2 + $0x300] sm:$0xff]
    %v778 = vld [vmem:[#allocation2 + $0x318] sm:$0xff]
    %v779 = vld [vmem:[#allocation2 + $0x330] sm:$0xff]
    %v780 = vld [vmem:[#allocation2 + $0x348] sm:$0xff]
    %v781 = vld [vmem:[#allocation2 + $0x360] sm:$0xff]
    %v782 = vld [vmem:[#allocation2 + $0x378] sm:$0xff]
    %v783 = vld [vmem:[#allocation2 + $0x390] sm:$0xff]
    %v784 = vld [vmem:[#allocation2 + $0x3a8] sm:$0xff]
    %v785 = vld [vmem:[#allocation2 + $0x3c0] sm:$0xff]
    %v786 = vld [vmem:[#allocation2 + $0x3d8] sm:$0xff]
    %v787 = vld [vmem:[#allocation2 + $0x3f0] sm:$0xff]
    %v788 = vld [vmem:[#allocation2 + $0x408] sm:$0xff]
    %v789 = vld [vmem:[#allocation2 + $0x420] sm:$0xff]
    %v790 = vld [vmem:[#allocation2 + $0x438] sm:$0xff]
    %v791 = vld [vmem:[#allocation2 + $0x450] sm:$0xff]
    %v792 = vld [vmem:[#allocation2 + $0x468] sm:$0xff]
    %793 = vmatprep.subr.mxu0 0.0
    %794 = vmatpush1.msra.mxu0 %v777
    %795 = vmatprep.subr.mxu0 0.0
    %796 = vmatpush1.msra.mxu0 %v778
    %797 = vmatprep.subr.mxu0 0.0
    %798 = vmatpush1.msra.mxu0 %v779
    %799 = vmatprep.subr.mxu0 0.0
    %800 = vmatpush1.msra.mxu0 %v780
    %801 = vmatprep.subr.mxu0 0.0
    %802 = vmatpush1.msra.mxu0 %v781
    %803 = vmatprep.subr.mxu0 0.0
    %804 = vmatpush1.msra.mxu0 %v782
    %805 = vmatprep.subr.mxu0 0.0
    %806 = vmatpush1.msra.mxu0 %v783
    %807 = vmatprep.subr.mxu0 0.0
    %808 = vmatpush1.msra.mxu0 %v784
    %809 = vmatprep.subr.mxu0 0.0
    %810 = vmatpush1.msra.mxu0 %v785
    %811 = vmatprep.subr.mxu0 0.0
    %812 = vmatpush1.msra.mxu0 %v786
    %813 = vmatprep.subr.mxu0 0.0
    %814 = vmatpush1.msra.mxu0 %v787
    %815 = vmatprep.subr.mxu0 0.0
    %816 = vmatpush1.msra.mxu0 %v788
    %817 = vmatprep.subr.mxu0 0.0
    %818 = vmatpush1.msra.mxu0 %v789
    %819 = vmatprep.subr.mxu0 0.0
    %820 = vmatpush1.msra.mxu0 %v790
    %821 = vmatprep.subr.mxu0 0.0
    %822 = vmatpush1.msra.mxu0 %v791
    %823 = vmatprep.subr.mxu0 0.0
    %824 = vmatpush1.msra.mxu0 %v792
    %825 = vmatprep.subr.mxu0 0.0
    %826 = vmatpush1.msra.mxu0 0.0
    %827 = vmatprep.subr.mxu0 0.0
    %828 = vmatpush1.msra.mxu0 0.0
    %829 = vmatprep.subr.mxu0 0.0
    %830 = vmatpush1.msra.mxu0 0.0
    %831 = vmatprep.subr.mxu0 0.0
    %832 = vmatpush1.msra.mxu0 0.0
    %833 = vmatprep.subr.mxu0 0.0
    %834 = vmatpush1.msra.mxu0 0.0
    %835 = vmatprep.subr.mxu0 0.0
    %836 = vmatpush1.msra.mxu0 0.0
    %837 = vmatprep.subr.mxu0 0.0
    %838 = vmatpush1.msra.mxu0 0.0
    %839 = vmatprep.subr.mxu0 0.0
    %840 = vmatpush1.msra.mxu0 0.0
    %841 = vmatprep.subr.mxu0 0.0
    %842 = vmatpush1.msra.mxu0 0.0
    %843 = vmatprep.subr.mxu0 0.0
    %844 = vmatpush1.msra.mxu0 0.0
    %845 = vmatprep.subr.mxu0 0.0
    %846 = vmatpush1.msra.mxu0 0.0
    %847 = vmatprep.subr.mxu0 0.0
    %848 = vmatpush1.msra.mxu0 0.0
    %849 = vmatprep.subr.mxu0 0.0
    %850 = vmatpush1.msra.mxu0 0.0
    %851 = vmatprep.subr.mxu0 0.0
    %852 = vmatpush1.msra.mxu0 0.0
    %853 = vmatprep.subr.mxu0 0.0
    %854 = vmatpush1.msra.mxu0 0.0
    %855 = vmatprep.subr.mxu0 0.0
    %856 = vmatpush1.msra.mxu0 0.0
    %857 = vmatprep.mubr.f32.mxu0 0.0
    %858 = vmatmul.mubr.f32.gmra.mrb[0].mxu0 %v773
    %v859 = vpop.f32.mrb[0].mxu0
    %v860 = vadd.f32 0.0, %v859
    %v861 = vpop.f32.mrb[0].mxu0
    %862 = vmatprep.mubr.f32.mxu0 0.0
    %863 = vmatmul.mubr.f32.gmra.mrb[0].mxu0 %v774
    %v864 = vpop.f32.mrb[0].mxu0
    %v865 = vadd.f32 0.0, %v864
    %v866 = vpop.f32.mrb[0].mxu0
    %867 = vmatprep.mubr.f32.mxu0 0.0
    %868 = vmatmul.mubr.f32.gmra.mrb[0].mxu0 %v775
    %v869 = vpop.f32.mrb[0].mxu0
    %v870 = vadd.f32 0.0, %v869
    %v871 = vpop.f32.mrb[0].mxu0
    %872 = vmatprep.mubr.f32.mxu0 0.0
    %873 = vmatmul.mubr.f32.gmra.mrb[0].mxu0 %v776
    %v874 = vpop.f32.mrb[0].mxu0
    %v875 = vadd.f32 0.0, %v874
    %v876 = vpop.f32.mrb[0].mxu0
    %877 = vdwg.mxu0
    %878 = vst [vmem:[%s3] sm:$0xff] %v860
    %879 = vst [vmem:[%s3 + $0x8] sm:$0xff] %v865
    %880 = vst [vmem:[%s3 + $0x10] sm:$0xff] %v870
    %881 = vst [vmem:[%s3 + $0x18] sm:$0xff] %v875
    // Predicated region
    $region18: #{generator_forward.1} parent=1 // pred_check
      _
    $region19: #{generator_forward.1} parent=1 // pred_check_branch
      %883 = sbr.rel (0) target = $region21
    $region20: #{generator_forward.1} parent=1 // pred_region
      _
    $region21: #{generator_forward.1} parent=1 // pred_fallthru
      _
    // Predicated region
    $region22: #{generator_forward.1} parent=1 // pred_check
      _
    $region23: #{generator_forward.1} parent=1 // pred_check_branch
      %885 = sbr.rel (0) target = $region25
    $region24: #{generator_forward.1} parent=1 // pred_region
      _
    $region25: #{generator_forward.1} parent=1 // pred_fallthru
      _
    %886 = vsyncpa [#allocation3], 1

</llo_original>
